<compile_context>
chip_gen: v6e
topology: v6e:2x2x1
jax: 0.10.0
libtpu: 0.0.40
codegen_flags: <defaults>
</compile_context>

<pallas_src>
import jax
import jax.numpy as jnp
from jax.experimental import pallas as pl
from jax.experimental.pallas import tpu as pltpu


def _sigmoid(v):
    return 1.0 / (1.0 + jnp.exp(-v))


def _round_up(x, m):
    return (x + m - 1) // m * m


def _make_se_kernel(inv_hw):
    def se_kernel(x_ref, w1t_ref, b1_ref, w2t_ref, b2_ref, o_ref):
        # x_ref block: (Nb, C1p, HWp) -- padded lanes/channels are zero.
        x = x_ref[...]                                               # native dtype, no f32 copy kept live
        # AdaptiveAvgPool2d(1): f32-accumulated sum over (padded) spatial, scaled by 1/HW_true.
        mean = jnp.sum(x.astype(jnp.float32), axis=2) * inv_hw        # (Nb, C1p), f32
        # Conv2d(c1, c2, 1) on the pooled 1x1 map == (Nb, C1p) @ (C1p, C2p) + bias
        y = jnp.dot(mean, w1t_ref[...], preferred_element_type=jnp.float32) + b1_ref[...]
        y = y * _sigmoid(y)                                           # SiLU
        # Conv2d(c2, c1, 1)
        z = jnp.dot(y, w2t_ref[...], preferred_element_type=jnp.float32) + b2_ref[...]
        z = _sigmoid(z)                                               # (Nb, C1p)
        # Residual add in native dtype, broadcast over the spatial (lane) axis.
        o_ref[...] = x + z.reshape(z.shape[0], z.shape[1], 1).astype(o_ref.dtype)
    return se_kernel


def se_forward(x_nchw, w1, b1, w2, b2):
    """x_nchw: (N, C1, H, W); w1: (C2, C1); b1: (C2, 1); w2: (C1, C2); b2: (C1, 1)."""
    N, C1, H, W = x_nchw.shape
    C2 = w1.shape[0]
    HW = H * W
    dtype = x_nchw.dtype
    itemsize = jnp.dtype(dtype).itemsize

    # Layout padding: channel axis -> sublane multiple, spatial axis -> lane (128) multiple.
    sub = 8 if itemsize >= 4 else (16 if itemsize == 2 else 32)
    C1p = _round_up(C1, sub)
    C2p = _round_up(C2, sub)
    HWp = _round_up(HW, 128)

    x = x_nchw.reshape(N, C1, HW)
    x = jnp.pad(x, ((0, 0), (0, C1p - C1), (0, HWp - HW)))            # zeros -> mean stays exact

    # Pre-transposed, zero-padded weights; biases as f32 row vectors.
    w1t = jnp.pad(w1.astype(jnp.float32).T, ((0, C1p - C1), (0, C2p - C2)))   # (C1p, C2p)
    b1r = jnp.pad(b1.astype(jnp.float32).reshape(1, C2), ((0, 0), (0, C2p - C2)))
    w2t = jnp.pad(w2.astype(jnp.float32).T, ((0, C2p - C2), (0, C1p - C1)))   # (C2p, C1p)
    b2r = jnp.pad(b2.astype(jnp.float32).reshape(1, C1), ((0, 0), (0, C1p - C1)))

    # Pick Nb (batch elements per grid step) against a VMEM budget for the
    # double-buffered in+out blocks, keeping >= 2 grid steps when N >= 2.
    block_bytes = C1p * HWp * itemsize
    budget = 48 * 1024 * 1024
    nb_fit = max(1, budget // (4 * block_bytes))
    Nb = int(min(N, nb_fit))
    if N >= 2:
        Nb = min(Nb, max(1, N // 2))
    while N % Nb != 0:   # require Nb | N
        Nb -= 1
    grid_n = N // Nb
    # TODO(synk): if a single (C1p, HWp) slab does not fit VMEM (huge H*W), fall back to a
    # two-pass pool/MLP + broadcast-add structure instead of one fused pass.

    weight_bytes = 4 * (w1t.size + b1r.size + w2t.size + b2r.size)
    needed = 4 * Nb * block_bytes + 2 * weight_bytes + (4 << 20)
    vmem_limit = int(min(64 << 20, max(needed, 16 << 20)))

    out = pl.pallas_call(
        _make_se_kernel(1.0 / HW),
        out_shape=jax.ShapeDtypeStruct((N, C1p, HWp), dtype),
        grid_spec=pltpu.PrefetchScalarGridSpec(
            num_scalar_prefetch=0,
            grid=(grid_n,),
            in_specs=[
                pl.BlockSpec((Nb, C1p, HWp), lambda n: (n, 0, 0)),
                pl.BlockSpec((C1p, C2p), lambda n: (0, 0)),
                pl.BlockSpec((1, C2p), lambda n: (0, 0)),
                pl.BlockSpec((C2p, C1p), lambda n: (0, 0)),
                pl.BlockSpec((1, C1p), lambda n: (0, 0)),
            ],
            out_specs=pl.BlockSpec((Nb, C1p, HWp), lambda n: (n, 0, 0)),
        ),
        compiler_params=pltpu.CompilerParams(
            dimension_semantics=("parallel",),
            vmem_limit_bytes=vmem_limit,
        ),
    )(x, w1t, b1r, w2t, b2r)

    return out[:, :C1, :HW].reshape(N, C1, H, W)


def se_reference(x, w1, b1, w2, b2):
    xf = x.astype(jnp.float32)
    mean = jnp.mean(xf, axis=(2, 3), keepdims=True)                    # (N, C1, 1, 1)
    y = jnp.einsum("oc,ncij->noij", w1, mean) + b1.reshape(1, -1, 1, 1)
    y = y * jax.nn.sigmoid(y)
    z = jnp.einsum("oc,ncij->noij", w2, y) + b2.reshape(1, -1, 1, 1)
    z = jax.nn.sigmoid(z)
    return (xf + z).astype(x.dtype)


if __name__ == "__main__":
    key = jax.random.PRNGKey(0)
    N, C1, C2, H, W = 2, 4, 8, 16, 16

    k_x, k_w1, k_b1, k_w2, k_b2 = jax.random.split(key, 5)
    x = jax.random.normal(k_x, (N, C1, H, W), dtype=jnp.float32)
    # 1x1 conv weights stored as dense (out, in) matrices (deterministic init)
    w1 = jax.random.normal(k_w1, (C2, C1), dtype=jnp.float32) * 0.1
    b1 = jax.random.normal(k_b1, (C2, 1), dtype=jnp.float32) * 0.1
    w2 = jax.random.normal(k_w2, (C1, C2), dtype=jnp.float32) * 0.1
    b2 = jax.random.normal(k_b2, (C1, 1), dtype=jnp.float32) * 0.1

    out = se_forward(x, w1, b1, w2, b2)
    out = jax.block_until_ready(out)

    ref = se_reference(x, w1, b1, w2, b2)
    assert out.shape == (N, C1, H, W)
    assert jnp.allclose(out, ref, atol=1e-5, rtol=1e-5), "mismatch vs reference"
    print("KERNEL_OK")
</pallas_src>

<mosaic_0001>
module attributes {stable_mosaic.version = 11 : i64} {
  func.func @se_kernel(%arg0: i32, %arg1: memref<1x8x256xf32, #tpu.memory_space<vmem>>, %arg2: memref<8x8xf32, #tpu.memory_space<vmem>>, %arg3: memref<1x8xf32, #tpu.memory_space<vmem>>, %arg4: memref<8x8xf32, #tpu.memory_space<vmem>>, %arg5: memref<1x8xf32, #tpu.memory_space<vmem>>, %arg6: memref<1x8x256xf32, #tpu.memory_space<vmem>>) attributes {dimension_semantics = [#tpu.dimension_semantics<parallel>], iteration_bounds = array<i64: 2>, scalar_prefetch = 0 : i64, scratch_operands = 0 : i64, tpu.core_type = #tpu.core_type<tc>, window_params = [{transform_indices = @transform_0, window_bounds = array<i64: 1, 8, 256>}, {pipeline_mode = #tpu.pipeline_mode<synchronous>, transform_indices = @transform_1, window_bounds = array<i64: 8, 8>}, {pipeline_mode = #tpu.pipeline_mode<synchronous>, transform_indices = @transform_2, window_bounds = array<i64: 1, 8>}, {pipeline_mode = #tpu.pipeline_mode<synchronous>, transform_indices = @transform_3, window_bounds = array<i64: 8, 8>}, {pipeline_mode = #tpu.pipeline_mode<synchronous>, transform_indices = @transform_4, window_bounds = array<i64: 1, 8>}, {transform_indices = @transform_5, window_bounds = array<i64: 1, 8, 256>}]} {
    %c0 = arith.constant 0 : index
    %c0_0 = arith.constant 0 : index
    %c0_1 = arith.constant 0 : index
    %0 = vector.load %arg1[%c0, %c0_0, %c0_1] : memref<1x8x256xf32, #tpu.memory_space<vmem>>, vector<1x8x256xf32>
    %cst = arith.constant dense<0.000000e+00> : vector<1x8xf32>
    %1 = vector.multi_reduction <add>, %0, %cst [2] : vector<1x8x256xf32> to vector<1x8xf32>
    %cst_2 = arith.constant 3.906250e-03 : f32
    %2 = vector.broadcast %cst_2 : f32 to vector<1x8xf32>
    %3 = arith.mulf %1, %2 : vector<1x8xf32>
    %c0_3 = arith.constant 0 : index
    %c0_4 = arith.constant 0 : index
    %4 = vector.load %arg2[%c0_3, %c0_4] : memref<8x8xf32, #tpu.memory_space<vmem>>, vector<8x8xf32>
    %cst_5 = arith.constant dense<0.000000e+00> : vector<1x8xf32>
    %5 = tpu.matmul %3, %4, %cst_5 {dimension_numbers = #tpu.dot_dimension_numbers<[1], [0], [0], [1], [0, 0, 1, 1], [], []>} : vector<1x8xf32>, vector<8x8xf32>, vector<1x8xf32> -> vector<1x8xf32>
    %c0_6 = arith.constant 0 : index
    %c0_7 = arith.constant 0 : index
    %6 = vector.load %arg3[%c0_6, %c0_7] : memref<1x8xf32, #tpu.memory_space<vmem>>, vector<1x8xf32>
    %7 = arith.addf %5, %6 : vector<1x8xf32>
    %cst_8 = arith.constant 0.000000e+00 : f32
    %8 = vector.broadcast %cst_8 : f32 to vector<1x8xf32>
    %9 = arith.subf %8, %7 : vector<1x8xf32>
    %10 = math.exp %9 : vector<1x8xf32>
    %cst_9 = arith.constant 1.000000e+00 : f32
    %11 = vector.broadcast %cst_9 : f32 to vector<1x8xf32>
    %12 = arith.addf %11, %10 : vector<1x8xf32>
    %cst_10 = arith.constant 1.000000e+00 : f32
    %13 = vector.broadcast %cst_10 : f32 to vector<1x8xf32>
    %14 = arith.divf %13, %12 : vector<1x8xf32>
    %15 = arith.mulf %7, %14 : vector<1x8xf32>
    %c0_11 = arith.constant 0 : index
    %c0_12 = arith.constant 0 : index
    %16 = vector.load %arg4[%c0_11, %c0_12] : memref<8x8xf32, #tpu.memory_space<vmem>>, vector<8x8xf32>
    %cst_13 = arith.constant dense<0.000000e+00> : vector<1x8xf32>
    %17 = tpu.matmul %15, %16, %cst_13 {dimension_numbers = #tpu.dot_dimension_numbers<[1], [0], [0], [1], [0, 0, 1, 1], [], []>} : vector<1x8xf32>, vector<8x8xf32>, vector<1x8xf32> -> vector<1x8xf32>
    %c0_14 = arith.constant 0 : index
    %c0_15 = arith.constant 0 : index
    %18 = vector.load %arg5[%c0_14, %c0_15] : memref<1x8xf32, #tpu.memory_space<vmem>>, vector<1x8xf32>
    %19 = arith.addf %17, %18 : vector<1x8xf32>
    %cst_16 = arith.constant 0.000000e+00 : f32
    %20 = vector.broadcast %cst_16 : f32 to vector<1x8xf32>
    %21 = arith.subf %20, %19 : vector<1x8xf32>
    %22 = math.exp %21 : vector<1x8xf32>
    %cst_17 = arith.constant 1.000000e+00 : f32
    %23 = vector.broadcast %cst_17 : f32 to vector<1x8xf32>
    %24 = arith.addf %23, %22 : vector<1x8xf32>
    %cst_18 = arith.constant 1.000000e+00 : f32
    %25 = vector.broadcast %cst_18 : f32 to vector<1x8xf32>
    %26 = arith.divf %25, %24 : vector<1x8xf32>
    %27 = vector.shape_cast %26 : vector<1x8xf32> to vector<1x8x1xf32>
    %28 = vector.broadcast %27 : vector<1x8x1xf32> to vector<1x8x256xf32>
    %29 = arith.addf %0, %28 : vector<1x8x256xf32>
    %c0_19 = arith.constant 0 : index
    %c0_20 = arith.constant 0 : index
    %c0_21 = arith.constant 0 : index
    %30 = vector.load %arg6[%c0_19, %c0_20, %c0_21] : memref<1x8x256xf32, #tpu.memory_space<vmem>>, vector<1x8x256xf32>
    tpu.vector_store %arg6[%c0_19, %c0_20, %c0_21], %29 {strides = array<i32>} : memref<1x8x256xf32, #tpu.memory_space<vmem>>, vector<1x8x256xf32>,
    return
  }
  func.func @transform_0(%arg0: i32) -> (i32, i32, i32) {
    %c0_i32 = arith.constant 0 : i32
    %c0_i32_0 = arith.constant 0 : i32
    %c0_i32_1 = arith.constant 0 : i32
    return %arg0, %c0_i32, %c0_i32_0 : i32, i32, i32
  }
  func.func @transform_1(%arg0: i32) -> (i32, i32) {
    %c0_i32 = arith.constant 0 : i32
    %c0_i32_0 = arith.constant 0 : i32
    %c0_i32_1 = arith.constant 0 : i32
    return %c0_i32, %c0_i32_0 : i32, i32
  }
  func.func @transform_2(%arg0: i32) -> (i32, i32) {
    %c0_i32 = arith.constant 0 : i32
    %c0_i32_0 = arith.constant 0 : i32
    %c0_i32_1 = arith.constant 0 : i32
    return %c0_i32, %c0_i32_0 : i32, i32
  }
  func.func @transform_3(%arg0: i32) -> (i32, i32) {
    %c0_i32 = arith.constant 0 : i32
    %c0_i32_0 = arith.constant 0 : i32
    %c0_i32_1 = arith.constant 0 : i32
    return %c0_i32, %c0_i32_0 : i32, i32
  }
  func.func @transform_4(%arg0: i32) -> (i32, i32) {
    %c0_i32 = arith.constant 0 : i32
    %c0_i32_0 = arith.constant 0 : i32
    %c0_i32_1 = arith.constant 0 : i32
    return %c0_i32, %c0_i32_0 : i32, i32
  }
  func.func @transform_5(%arg0: i32) -> (i32, i32, i32) {
    %c0_i32 = arith.constant 0 : i32
    %c0_i32_0 = arith.constant 0 : i32
    %c0_i32_1 = arith.constant 0 : i32
    return %arg0, %c0_i32, %c0_i32_0 : i32, i32, i32
  }
}

</mosaic_0001>

<llo_original>
// kernel: tpu_custom_call.1
$region0: #{tpu_custom_call.1}
  #allocation0 [shape = 'u32[]', space=smem, size = 0x4, offset = 0x4, fixed_abs, tag = 'smem constant byte address 0x4 - core index']
  #allocation1 [shape = 'u32[144,128]{1,0:T(1,128)}', space=vmem, size = 0x12000, scoped, tag = 'internal scratch']
  %s0 = inlined_call_operand.hbm [shape: f32[2,8,256], index: 0, kind: input, shape index: {}]
  %s1 = inlined_call_operand.hbm [shape: f32[8,8], index: 1, kind: input, shape index: {}]
  %s2 = inlined_call_operand.vmem [shape: f32[1,8], index: 2, kind: input, shape index: {}]
  %s3 = inlined_call_operand.hbm [shape: f32[8,8], index: 3, kind: input, shape index: {}]
  %s4 = inlined_call_operand.vmem [shape: f32[1,8], index: 4, kind: input, shape index: {}]
  %s5 = inlined_call_operand.hbm [shape: f32[2,8,256], index: 5, kind: output, shape index: {}]
  %s6 = sld [smem:[#allocation0]]
  $region65: #{tpu_custom_call.1} parent=0
    _
  %s8 = ssub.s32 1, %s6
  %s9 = scalar_select 0, %s8, %s6
  $region1: #{tpu_custom_call.1} parent=0
    #allocation2 [shape = 'u8[16384]{0}', space=vmem, size = 0x4000, scoped, tag = 'input window, operand 0']
    #allocation3 [shape = 's32[2]{0}', space=sflag, size = 0x8, scoped, tag = 'scoped memory for tpu_custom_call.1']
    #allocation4 [shape = 's32[2]{0}', space=sflag, size = 0x8, scoped, tag = 'scoped memory for tpu_custom_call.1']
    #allocation5 [shape = 'u8[4096]{0}', space=vmem, size = 0x1000, scoped, tag = 'input window, operand 1, single buffered']
    #allocation6 [shape = 's32[1]{0}', space=sflag, size = 0x4, scoped, tag = 'scoped memory for tpu_custom_call.1']
    #allocation7 [shape = 'u8[4096]{0}', space=vmem, size = 0x1000, scoped, tag = 'input window, operand 3, single buffered']
    #allocation8 [shape = 'u8[16384]{0}', space=vmem, size = 0x4000, scoped, tag = 'output window, operand 0']
    %10 = vsyncpa [#allocation3], 0
    %s11 = scalar_lea.sflag [#allocation3], 1
    %12 = vsyncpa %s11, 0
    %13 = vsyncpa [#allocation6], 0
    %14 = vsyncpa [#allocation4], 0
    %s15 = scalar_lea.sflag [#allocation4], 1
    %16 = vsyncpa %s15, 0
    loop: start=0, step=1, limit=4
    $region2: #{tpu_custom_call.1} parent=1 // loop_pre_header
      _
    $region3: #{tpu_custom_call.1} parent=1 // loop_header
      %s18 = sphi 0, %s22
      %p19 = scmp.ge.s32.totalorder %s18, 4
      %s28 = sphi 0, %s30
      %s31 = sphi 0, %s28
      %s32 = sphi 0, %s31
      %s48 = sphi 0, %s32
      %s52 = sphi 0, %s52
      %s54 = sphi 0, %s52
      %s55 = sphi 0, %s54
      %s69 = sphi 0, %s55
      %s73 = sphi 0, %s73
      %s75 = sphi 0, %s73
      %s76 = sphi 0, %s75
      %s90 = sphi 0, %s76
      %s94 = sphi 0, %s94
      %s96 = sphi 0, %s94
      %s97 = sphi 0, %s96
      %s111 = sphi 0, %s97
      %s115 = sphi 0, %s115
      %s117 = sphi 0, %s115
      %s118 = sphi 0, %s117
      %s132 = sphi 0, %s118
      %s138 = sphi 0, %s140
      %s141 = sphi 0, %s138
      %s142 = sphi 0, %s141
      %s158 = sphi 0, %s142
    $region4: #{tpu_custom_call.1} parent=1 // loop_header_branch
      %21 = sbr.rel (%p19) target = $region8
    $region5: #{tpu_custom_call.1} parent=1 // loop_body
      %s23 = ssub.s32 %s18, 1
      %s24 = ssub.s32 %s18, 2
      %s25 = sadd.s32 %s18, 1
      %s26 = ssub.s32 %s18, %s25
      %p27 = scmp.eq.s32.totalorder %s26, 0
      %s29 = sadd.s32 %s28, 1
      %s30 = scalar_select %p27, %s28, %s29
      %p33 = pneg %p27
      %p34 = scmp.eq.s32.totalorder %s18, 1
      %p35 = por %p33, %p34
      %p36 = scmp.ne.s32.totalorder %s28, %s31
      %p37 = scmp.eq.s32.totalorder %s18, 0
      %p38 = por %p36, %p37
      %p39 = scmp.ne.s32.totalorder %s28, %s31
      %p40 = scmp.eq.s32.totalorder %s23, 1
      %p41 = por %p39, %p40
      %p42 = scmp.ne.s32.totalorder %s31, %s32
      %p43 = scmp.eq.s32.totalorder %s23, 0
      %p44 = por %p42, %p43
      %p45 = scmp.ne.s32.totalorder %s31, %s32
      %p46 = scmp.eq.s32.totalorder %s24, 1
      %p47 = por %p45, %p46
      %p49 = scmp.ne.s32.totalorder %s32, %s48
      %p50 = scmp.eq.s32.totalorder %s24, 0
      %p51 = por %p49, %p50
      %s53 = sadd.s32 %s52, 1
      %p56 = scmp.eq.s32.totalorder %s18, 1
      %p57 = scmp.ne.s32.totalorder %s52, %s54
      %p58 = scmp.eq.s32.totalorder %s18, 0
      %p59 = por %p57, %p58
      %p60 = scmp.ne.s32.totalorder %s52, %s54
      %p61 = scmp.eq.s32.totalorder %s23, 1
      %p62 = por %p60, %p61
      %p63 = scmp.ne.s32.totalorder %s54, %s55
      %p64 = scmp.eq.s32.totalorder %s23, 0
      %p65 = por %p63, %p64
      %p66 = scmp.ne.s32.totalorder %s54, %s55
      %p67 = scmp.eq.s32.totalorder %s24, 1
      %p68 = por %p66, %p67
      %p70 = scmp.ne.s32.totalorder %s55, %s69
      %p71 = scmp.eq.s32.totalorder %s24, 0
      %p72 = por %p70, %p71
      %s74 = sadd.s32 %s73, 1
      %p77 = scmp.eq.s32.totalorder %s18, 1
      %p78 = scmp.ne.s32.totalorder %s73, %s75
      %p79 = scmp.eq.s32.totalorder %s18, 0
      %p80 = por %p78, %p79
      %p81 = scmp.ne.s32.totalorder %s73, %s75
      %p82 = scmp.eq.s32.totalorder %s23, 1
      %p83 = por %p81, %p82
      %p84 = scmp.ne.s32.totalorder %s75, %s76
      %p85 = scmp.eq.s32.totalorder %s23, 0
      %p86 = por %p84, %p85
      %p87 = scmp.ne.s32.totalorder %s75, %s76
      %p88 = scmp.eq.s32.totalorder %s24, 1
      %p89 = por %p87, %p88
      %p91 = scmp.ne.s32.totalorder %s76, %s90
      %p92 = scmp.eq.s32.totalorder %s24, 0
      %p93 = por %p91, %p92
      %s95 = sadd.s32 %s94, 1
      %p98 = scmp.eq.s32.totalorder %s18, 1
      %p99 = scmp.ne.s32.totalorder %s94, %s96
      %p100 = scmp.eq.s32.totalorder %s18, 0
      %p101 = por %p99, %p100
      %p102 = scmp.ne.s32.totalorder %s94, %s96
      %p103 = scmp.eq.s32.totalorder %s23, 1
      %p104 = por %p102, %p103
      %p105 = scmp.ne.s32.totalorder %s96, %s97
      %p106 = scmp.eq.s32.totalorder %s23, 0
      %p107 = por %p105, %p106
      %p108 = scmp.ne.s32.totalorder %s96, %s97
      %p109 = scmp.eq.s32.totalorder %s24, 1
      %p110 = por %p108, %p109
      %p112 = scmp.ne.s32.totalorder %s97, %s111
      %p113 = scmp.eq.s32.totalorder %s24, 0
      %p114 = por %p112, %p113
      %s116 = sadd.s32 %s115, 1
      %p119 = scmp.eq.s32.totalorder %s18, 1
      %p120 = scmp.ne.s32.totalorder %s115, %s117
      %p121 = scmp.eq.s32.totalorder %s18, 0
      %p122 = por %p120, %p121
      %p123 = scmp.ne.s32.totalorder %s115, %s117
      %p124 = scmp.eq.s32.totalorder %s23, 1
      %p125 = por %p123, %p124
      %p126 = scmp.ne.s32.totalorder %s117, %s118
      %p127 = scmp.eq.s32.totalorder %s23, 0
      %p128 = por %p126, %p127
      %p129 = scmp.ne.s32.totalorder %s117, %s118
      %p130 = scmp.eq.s32.totalorder %s24, 1
      %p131 = por %p129, %p130
      %p133 = scmp.ne.s32.totalorder %s118, %s132
      %p134 = scmp.eq.s32.totalorder %s24, 0
      %p135 = por %p133, %p134
      %s136 = ssub.s32 %s18, %s25
      %p137 = scmp.eq.s32.totalorder %s136, 0
      %s139 = sadd.s32 %s138, 1
      %s140 = scalar_select %p137, %s138, %s139
      %p143 = pneg %p137
      %p144 = scmp.eq.s32.totalorder %s18, 1
      %p145 = por %p143, %p144
      %p146 = scmp.ne.s32.totalorder %s138, %s141
      %p147 = scmp.eq.s32.totalorder %s18, 0
      %p148 = por %p146, %p147
      %p149 = scmp.ne.s32.totalorder %s138, %s141
      %p150 = scmp.eq.s32.totalorder %s23, 1
      %p151 = por %p149, %p150
      %p152 = scmp.ne.s32.totalorder %s141, %s142
      %p153 = scmp.eq.s32.totalorder %s23, 0
      %p154 = por %p152, %p153
      %p155 = scmp.ne.s32.totalorder %s141, %s142
      %p156 = scmp.eq.s32.totalorder %s24, 1
      %p157 = por %p155, %p156
      %p159 = scmp.ne.s32.totalorder %s142, %s158
      %p160 = scmp.eq.s32.totalorder %s24, 0
      %p161 = por %p159, %p160
      %p162 = scmp.le.s32.totalorder 1, %s18
      %p163 = scmp.lt.s32.totalorder %s18, 3
      %p164 = pnand %p162, %p163
      %p165 = pneg %p164
      // Predicated region
      $region9: #{tpu_custom_call.1} parent=5 // pred_check
        _
      $region10: #{tpu_custom_call.1} parent=5 // pred_check_branch
        %167 = sbr.rel (%p164) target = $region12
      $region11: #{tpu_custom_call.1} parent=5 // pred_region
        %s168 = ssub.s32 %s18, 1
        // Predicated region
        $region13: #{tpu_custom_call.1} parent=11 // pred_check
          %p169 = pneg %p65
        $region14: #{tpu_custom_call.1} parent=11 // pred_check_branch
          %171 = sbr.rel (%p169) target = $region16
        $region15: #{tpu_custom_call.1} parent=11 // pred_region
          %s173 = ssub.s32 128, 128
          %174 = vsyncadd [#allocation6], %s173
          %s176 = sshll.u32 [#allocation5], 4
          %s177 = int_to_ptr.vmem [resolvable:$true] %s176
          %179 = dma.hbm_to_vmem [thread:$0]  %s1, 128, %s177, [#allocation6]
        $region16: #{tpu_custom_call.1} parent=11 // pred_fallthru
          _
        // Predicated region
        $region17: #{tpu_custom_call.1} parent=11 // pred_check
          %p180 = pneg %p86
        $region18: #{tpu_custom_call.1} parent=11 // pred_check_branch
          %182 = sbr.rel (%p180) target = $region20
        $region19: #{tpu_custom_call.1} parent=11 // pred_region
          _
        $region20: #{tpu_custom_call.1} parent=11 // pred_fallthru
          _
        // Predicated region
        $region21: #{tpu_custom_call.1} parent=11 // pred_check
          %p183 = pneg %p107
        $region22: #{tpu_custom_call.1} parent=11 // pred_check_branch
          %185 = sbr.rel (%p183) target = $region24
        $region23: #{tpu_custom_call.1} parent=11 // pred_region
          %s187 = ssub.s32 128, 128
          %188 = vsyncadd [#allocation6], %s187
          %s190 = sshll.u32 [#allocation7], 4
          %s191 = int_to_ptr.vmem [resolvable:$true] %s190
          %193 = dma.hbm_to_vmem [thread:$0]  %s3, 128, %s191, [#allocation6]
        $region24: #{tpu_custom_call.1} parent=11 // pred_fallthru
          _
        // Predicated region
        $region25: #{tpu_custom_call.1} parent=11 // pred_check
          %p194 = pneg %p128
        $region26: #{tpu_custom_call.1} parent=11 // pred_check_branch
          %196 = sbr.rel (%p194) target = $region28
        $region27: #{tpu_custom_call.1} parent=11 // pred_region
          _
        $region28: #{tpu_custom_call.1} parent=11 // pred_fallthru
          _
      $region12: #{tpu_custom_call.1} parent=5 // pred_fallthru
        _
      %p197 = scmp.lt.s32.totalorder %s18, 2
      // Predicated region
      $region29: #{tpu_custom_call.1} parent=5 // pred_check
        %p198 = pneg %p197
      $region30: #{tpu_custom_call.1} parent=5 // pred_check_branch
        %200 = sbr.rel (%p198) target = $region32
      $region31: #{tpu_custom_call.1} parent=5 // pred_region
        // Predicated region
        $region33: #{tpu_custom_call.1} parent=31 // pred_check
          %p201 = pneg %p38
        $region34: #{tpu_custom_call.1} parent=31 // pred_check_branch
          %203 = sbr.rel (%p201) target = $region36
        $region35: #{tpu_custom_call.1} parent=31 // pred_region
          %s204 = sand.u32 %s28, 1
          %s205 = scalar_lea.sflag [#allocation3], %s204
          %s206 = sand.u32 %s28, 1
          %s207 = smul.addr %s206, 16
          %s208 = scalar_lea.vmem [#allocation2], %s207
          %s210 = ssub.s32 256, 256
          %211 = vsyncadd %s205, %s210
          %s212 = smul.addr %s18, 2
          %s213 = smul.addr %s212, 128
          %s214 = scalar_lea.hbm %s0, %s213
          %s216 = sshll.u32 %s208, 4
          %s217 = int_to_ptr.vmem [resolvable:$true] %s216
          %219 = dma.hbm_to_vmem [thread:$0]  %s214, 256, %s217, %s205
        $region36: #{tpu_custom_call.1} parent=31 // pred_fallthru
          _
      $region32: #{tpu_custom_call.1} parent=5 // pred_fallthru
        _
      %p220 = scmp.le.s32.totalorder 1, %s18
      %p221 = scmp.lt.s32.totalorder %s18, 3
      %p222 = pnand %p220, %p221
      %p223 = pneg %p222
      // Predicated region
      $region37: #{tpu_custom_call.1} parent=5 // pred_check
        _
      $region38: #{tpu_custom_call.1} parent=5 // pred_check_branch
        %225 = sbr.rel (%p222) target = $region40
      $region39: #{tpu_custom_call.1} parent=5 // pred_region
        %s226 = ssub.s32 %s18, 1
        %s227 = sand.u32 %s31, 1
        %s228 = scalar_lea.sflag [#allocation3], %s227
        %s229 = sand.u32 %s31, 1
        %s230 = smul.addr %s229, 16
        %s231 = scalar_lea.vmem [#allocation2], %s230
        // Predicated region
        $region41: #{tpu_custom_call.1} parent=39 // pred_check
          %p232 = pneg %p44
        $region42: #{tpu_custom_call.1} parent=39 // pred_check_branch
          %234 = sbr.rel (%p232) target = $region44
        $region43: #{tpu_custom_call.1} parent=39 // pred_region
          %235 = dma.done %s228, 256
        $region44: #{tpu_custom_call.1} parent=39 // pred_fallthru
          _
        // Predicated region
        $region45: #{tpu_custom_call.1} parent=39 // pred_check
          %p236 = pneg %p65
        $region46: #{tpu_custom_call.1} parent=39 // pred_check_branch
          %238 = sbr.rel (%p236) target = $region48
        $region47: #{tpu_custom_call.1} parent=39 // pred_region
          %239 = dma.done [#allocation6], 128
        $region48: #{tpu_custom_call.1} parent=39 // pred_fallthru
          _
        // Predicated region
        $region49: #{tpu_custom_call.1} parent=39 // pred_check
          %p240 = pneg %p107
        $region50: #{tpu_custom_call.1} parent=39 // pred_check_branch
          %242 = sbr.rel (%p240) target = $region52
        $region51: #{tpu_custom_call.1} parent=39 // pred_region
          %243 = dma.done [#allocation6], 128
        $region52: #{tpu_custom_call.1} parent=39 // pred_fallthru
          _
        %s244 = sand.u32 %s31, 1
        %s245 = scalar_lea.sflag [#allocation3], %s244
        %s246 = sand.u32 %s31, 1
        %s247 = smul.addr %s246, 16
        %s248 = scalar_lea.vmem [#allocation2], %s247
        %p249 = pneg %p44
        %p250 = pneg %p41
        %p251 = pneg %p65
        %p252 = pneg %p62
        %p253 = pneg %p86
        %p254 = pneg %p83
        %p255 = pneg %p107
        %p256 = pneg %p104
        %p257 = pneg %p128
        %p258 = pneg %p125
        %p259 = pneg %p154
        %p260 = pneg %p151
        %s261 = sand.u32 %s141, 1
        %s262 = scalar_lea.sflag [#allocation4], %s261
        %s263 = sand.u32 %s141, 1
        %s264 = smul.addr %s263, 16
        %s265 = scalar_lea.vmem [#allocation8], %s264
        %v266 = vld [vmem:[%s231] sm:$0xff]
        %v267 = vld [vmem:[%s231 + $0x8] sm:$0xff]
        %v268 = vadd.f32 %v266, %v267
        %269 = vadd.xlane.f32.xlu0 %v268
        %v270 = vpop.xlane.xlu0 %269
        %v271 = vmul.f32 %v270, 0.00390625
        %v272 = vld [vmem:[#allocation5] sm:$0xff]
        %v273 = vld [vmem:[%s2] sm:$0x1]
        %v275 = vlaneseq
        %v276 = vand.u32 %v275, 127
        %v277 = vlaneseq
        %v278 = vshrl.u32 %v277, 7
        %v279 = vsub.s32 %v276, %v278
        %v280 = vrot.slane %v271, %v279
        %vm281 = vcmask 64512
        %v282 = vsel %vm281, %v280, 0
        %284 = vmatprep.subr.mxu0 0.0
        %285 = vmatpush1.msra.mxu0 0.0
        %286 = vmatprep.subr.mxu0 0.0
        %287 = vmatpush1.msra.mxu0 0.0
        %288 = vmatprep.subr.mxu0 0.0
        %289 = vmatpush1.msra.mxu0 0.0
        %290 = vmatprep.subr.mxu0 0.0
        %291 = vmatpush1.msra.mxu0 0.0
        %292 = vmatprep.subr.mxu0 0.0
        %293 = vmatpush1.msra.mxu0 0.0
        %294 = vmatprep.subr.mxu0 0.0
        %295 = vmatpush1.msra.mxu0 0.0
        %296 = vmatprep.subr.mxu0 0.0
        %297 = vmatpush1.msra.mxu0 0.0
        %298 = vmatprep.subr.mxu0 0.0
        %299 = vmatpush1.msra.mxu0 0.0
        %300 = vmatprep.subr.mxu0 0.0
        %301 = vmatpush1.msra.mxu0 0.0
        %302 = vmatprep.subr.mxu0 0.0
        %303 = vmatpush1.msra.mxu0 0.0
        %304 = vmatprep.subr.mxu0 0.0
        %305 = vmatpush1.msra.mxu0 0.0
        %306 = vmatprep.subr.mxu0 0.0
        %307 = vmatpush1.msra.mxu0 0.0
        %308 = vmatprep.subr.mxu0 0.0
        %309 = vmatpush1.msra.mxu0 0.0
        %310 = vmatprep.subr.mxu0 0.0
        %311 = vmatpush1.msra.mxu0 0.0
        %312 = vmatprep.subr.mxu0 0.0
        %313 = vmatpush1.msra.mxu0 0.0
        %314 = vmatprep.subr.mxu0 0.0
        %315 = vmatpush1.msra.mxu0 %v272
        %316 = vmatprep.subr.mxu0 0.0
        %317 = vmatpush2.msra.mxu0 0.0
        %318 = vmatprep.subr.mxu0 0.0
        %319 = vmatpush2.msra.mxu0 0.0
        %320 = vmatprep.subr.mxu0 0.0
        %321 = vmatpush2.msra.mxu0 0.0
        %322 = vmatprep.subr.mxu0 0.0
        %323 = vmatpush2.msra.mxu0 0.0
        %324 = vmatprep.subr.mxu0 0.0
        %325 = vmatpush2.msra.mxu0 0.0
        %326 = vmatprep.subr.mxu0 0.0
        %327 = vmatpush2.msra.mxu0 0.0
        %328 = vmatprep.subr.mxu0 0.0
        %329 = vmatpush2.msra.mxu0 0.0
        %330 = vmatprep.subr.mxu0 0.0
        %331 = vmatpush2.msra.mxu0 0.0
        %332 = vmatprep.subr.mxu0 0.0
        %333 = vmatpush2.msra.mxu0 0.0
        %334 = vmatprep.subr.mxu0 0.0
        %335 = vmatpush2.msra.mxu0 0.0
        %336 = vmatprep.subr.mxu0 0.0
        %337 = vmatpush2.msra.mxu0 0.0
        %338 = vmatprep.subr.mxu0 0.0
        %339 = vmatpush2.msra.mxu0 0.0
        %340 = vmatprep.subr.mxu0 0.0
        %341 = vmatpush2.msra.mxu0 0.0
        %342 = vmatprep.subr.mxu0 0.0
        %343 = vmatpush2.msra.mxu0 0.0
        %344 = vmatprep.subr.mxu0 0.0
        %345 = vmatpush2.msra.mxu0 0.0
        %346 = vmatprep.subr.mxu0 0.0
        %347 = vmatpush2.msra.mxu0 0.0
        %348 = vmatprep.mubr.f32.mxu0 0.0
        %349 = vmatmul.mubr.f32.gmra.mxu0 %v282
        %v350 = vpop.f32.mrf.mxu0
        %v351 = vadd.f32 %v273, %v350
        %v352 = vpop.f32.mrf.mxu0
        %353 = vdwg.mxu0
        %v354 = vsub.f32 0.0, %v351
        %v355 = vmul.f32 %v354, 1.442695
        %v356 = vpow.pop %v355
        %v357 = vadd.f32 %v356, 1.0
        %v358 = vrcp.pop %v357
        %v359 = vmul.f32 1.0, %v358
        %v360 = vmul.f32 %v351, %v359
        %v361 = vld [vmem:[#allocation7] sm:$0xff]
        %v362 = vld [vmem:[%s4] sm:$0x1]
        %v364 = vsel %vm281, %v360, 0
        %366 = vmatprep.subr.mxu0 0.0
        %367 = vmatpush1.msra.mxu0 0.0
        %368 = vmatprep.subr.mxu0 0.0
        %369 = vmatpush1.msra.mxu0 0.0
        %370 = vmatprep.subr.mxu0 0.0
        %371 = vmatpush1.msra.mxu0 0.0
        %372 = vmatprep.subr.mxu0 0.0
        %373 = vmatpush1.msra.mxu0 0.0
        %374 = vmatprep.subr.mxu0 0.0
        %375 = vmatpush1.msra.mxu0 0.0
        %376 = vmatprep.subr.mxu0 0.0
        %377 = vmatpush1.msra.mxu0 0.0
        %378 = vmatprep.subr.mxu0 0.0
        %379 = vmatpush1.msra.mxu0 0.0
        %380 = vmatprep.subr.mxu0 0.0
        %381 = vmatpush1.msra.mxu0 0.0
        %382 = vmatprep.subr.mxu0 0.0
        %383 = vmatpush1.msra.mxu0 0.0
        %384 = vmatprep.subr.mxu0 0.0
        %385 = vmatpush1.msra.mxu0 0.0
        %386 = vmatprep.subr.mxu0 0.0
        %387 = vmatpush1.msra.mxu0 0.0
        %388 = vmatprep.subr.mxu0 0.0
        %389 = vmatpush1.msra.mxu0 0.0
        %390 = vmatprep.subr.mxu0 0.0
        %391 = vmatpush1.msra.mxu0 0.0
        %392 = vmatprep.subr.mxu0 0.0
        %393 = vmatpush1.msra.mxu0 0.0
        %394 = vmatprep.subr.mxu0 0.0
        %395 = vmatpush1.msra.mxu0 0.0
        %396 = vmatprep.subr.mxu0 0.0
        %397 = vmatpush1.msra.mxu0 %v361
        %398 = vmatprep.subr.mxu0 0.0
        %399 = vmatpush2.msra.mxu0 0.0
        %400 = vmatprep.subr.mxu0 0.0
        %401 = vmatpush2.msra.mxu0 0.0
        %402 = vmatprep.subr.mxu0 0.0
        %403 = vmatpush2.msra.mxu0 0.0
        %404 = vmatprep.subr.mxu0 0.0
        %405 = vmatpush2.msra.mxu0 0.0
        %406 = vmatprep.subr.mxu0 0.0
        %407 = vmatpush2.msra.mxu0 0.0
        %408 = vmatprep.subr.mxu0 0.0
        %409 = vmatpush2.msra.mxu0 0.0
        %410 = vmatprep.subr.mxu0 0.0
        %411 = vmatpush2.msra.mxu0 0.0
        %412 = vmatprep.subr.mxu0 0.0
        %413 = vmatpush2.msra.mxu0 0.0
        %414 = vmatprep.subr.mxu0 0.0
        %415 = vmatpush2.msra.mxu0 0.0
        %416 = vmatprep.subr.mxu0 0.0
        %417 = vmatpush2.msra.mxu0 0.0
        %418 = vmatprep.subr.mxu0 0.0
        %419 = vmatpush2.msra.mxu0 0.0
        %420 = vmatprep.subr.mxu0 0.0
        %421 = vmatpush2.msra.mxu0 0.0
        %422 = vmatprep.subr.mxu0 0.0
        %423 = vmatpush2.msra.mxu0 0.0
        %424 = vmatprep.subr.mxu0 0.0
        %425 = vmatpush2.msra.mxu0 0.0
        %426 = vmatprep.subr.mxu0 0.0
        %427 = vmatpush2.msra.mxu0 0.0
        %428 = vmatprep.subr.mxu0 0.0
        %429 = vmatpush2.msra.mxu0 0.0
        %430 = vmatprep.mubr.f32.mxu0 0.0
        %431 = vmatmul.mubr.f32.gmra.mxu0 %v364
        %v432 = vpop.f32.mrf.mxu0
        %v433 = vadd.f32 %v362, %v432
        %v434 = vpop.f32.mrf.mxu0
        %435 = vdwg.mxu0
        %v436 = vsub.f32 0.0, %v433
        %v437 = vmul.f32 %v436, 1.442695
        %v438 = vpow.pop %v437
        %v439 = vadd.f32 %v438, 1.0
        %v440 = vrcp.pop %v439
        %v441 = vmul.f32 1.0, %v440
        %v442 = vlaneseq
        %v443 = vshrl.u32 %v442, 7
        %v444 = vsub.s32 0, %v443
        %v445 = vrot.slane %v441, %v444
        %447 = vbcast.lane.b32.xlu0 %v445, 256
        %v448 = vpop.permute.xlu0 %447
        %v449 = vadd.f32 %v266, %v448
        %v450 = vadd.f32 %v267, %v448
        %451 = vst [vmem:[%s265] sm:$0xff] %v449
        %452 = vst [vmem:[%s265 + $0x8] sm:$0xff] %v450
        %s453 = sand.u32 %s141, 1
        %s454 = scalar_lea.sflag [#allocation4], %s453
        %s455 = sand.u32 %s141, 1
        %s456 = smul.addr %s455, 16
        %s457 = scalar_lea.vmem [#allocation8], %s456
        // Predicated region
        $region53: #{tpu_custom_call.1} parent=39 // pred_check
          %p458 = pneg %p151
        $region54: #{tpu_custom_call.1} parent=39 // pred_check_branch
          %460 = sbr.rel (%p458) target = $region56
        $region55: #{tpu_custom_call.1} parent=39 // pred_region
          %s462 = ssub.s32 256, 256
          %463 = vsyncadd %s454, %s462
          %s464 = smul.addr %s23, 2
          %s465 = smul.addr %s464, 128
          %s466 = scalar_lea.hbm %s5, %s465
          %s468 = sshll.u32 %s457, 4
          %s469 = int_to_ptr.vmem [resolvable:$true] %s468
          %471 = dma.vmem_to_hbm [thread:$0]  %s469, 256, %s466, %s454
        $region56: #{tpu_custom_call.1} parent=39 // pred_fallthru
          _
      $region40: #{tpu_custom_call.1} parent=5 // pred_fallthru
        _
      %p472 = scmp.le.s32.totalorder 2, %s18
      // Predicated region
      $region57: #{tpu_custom_call.1} parent=5 // pred_check
        %p473 = pneg %p472
      $region58: #{tpu_custom_call.1} parent=5 // pred_check_branch
        %475 = sbr.rel (%p473) target = $region60
      $region59: #{tpu_custom_call.1} parent=5 // pred_region
        %s476 = ssub.s32 %s18, 2
        // Predicated region
        $region61: #{tpu_custom_call.1} parent=59 // pred_check
          %p477 = pneg %p157
        $region62: #{tpu_custom_call.1} parent=59 // pred_check_branch
          %479 = sbr.rel (%p477) target = $region64
        $region63: #{tpu_custom_call.1} parent=59 // pred_region
          %s480 = sand.u32 %s142, 1
          %s481 = scalar_lea.sflag [#allocation4], %s480
          %s482 = sand.u32 %s142, 1
          %s483 = smul.addr %s482, 16
          %s484 = scalar_lea.vmem [#allocation8], %s483
          %485 = dma.done %s481, 256
        $region64: #{tpu_custom_call.1} parent=59 // pred_fallthru
          _
      $region60: #{tpu_custom_call.1} parent=5 // pred_fallthru
        _
    $region6: #{tpu_custom_call.1} parent=1 // loop_footer
      %s22 = sadd.s32 1, %s18
    $region7: #{tpu_custom_call.1} parent=1 // loop_footer_branch
      %17 = sbr.rel target = $region3
    $region8: #{tpu_custom_call.1} parent=1 // loop_exit
      _
    %486 = vsyncpa [#allocation3], 1
    %s487 = scalar_lea.sflag [#allocation3], 1
    %488 = vsyncpa %s487, 1
    %489 = vsyncpa [#allocation6], 1
    %490 = vsyncpa [#allocation4], 1
    %s491 = scalar_lea.sflag [#allocation4], 1
    %492 = vsyncpa %s491, 1

</llo_original>
